<compile_context>
chip_gen: v7x
topology: tpu7x:2x2x1
jax: 0.10.0
libtpu: 0.0.40
codegen_flags: <defaults>
</compile_context>

<pallas_src>
import functools

import jax
import jax.numpy as jnp
from jax.experimental import pallas as pl
from jax.experimental.pallas import tpu as pltpu


# ----------------------------------------------------------------------------- tiling


def _round_up(n, m):
    return ((n + m - 1) // m) * m


def _vmem_estimate_bytes(tile_b, D, P, in_itemsize):
    """Rough VMEM footprint: double-buffered streams + resident prototypes + temps."""
    x_tile = 2 * tile_b * D * in_itemsize          # x tile, double buffered
    y_tile = 2 * tile_b * 4                        # labels tile
    out_tile = 2 * 8 * 128 * 4                     # per-tile partial-sum block
    protos = 2 * P * D * in_itemsize               # resident prototypes
    small = 2 * 2 * max(P, 128) * 4                # plabels + ||p||^2 rows
    # f32 temporaries in the body: upcast x, dist and a few (TB, P) where/masks
    tmp = tile_b * D * 4 + 4 * tile_b * max(P, 128) * 4
    return x_tile + y_tile + out_tile + protos + small + tmp


def _choose_tile_b(B, D, P, in_itemsize, requested=512, vmem_budget_bytes=48 << 20):
    """Main tuning knob: biggest sublane-aligned batch tile that fits the VMEM budget.

    The 48 MiB budget leaves headroom on v7x's 64 MiB physical VMEM; on v5e/v6e
    (128 MiB) the same tile is comfortably small.  For real batches prefer
    requested tiles that are multiples of 256 (MXU-native on v6e/v7x).
    """
    tb = min(_round_up(requested, 8), _round_up(B, 8))
    while tb > 8 and _vmem_estimate_bytes(tb, D, P, in_itemsize) > vmem_budget_bytes:
        tb = _round_up(tb // 2, 8)
    return tb


def _vmem_limit_bytes(tile_b, D, P, in_itemsize):
    est = _vmem_estimate_bytes(tile_b, D, P, in_itemsize)
    # 2x headroom, clamped to [16 MiB, 64 MiB] (v7x physical VMEM per TensorCore).
    return int(min(max(2 * est, 16 << 20), 64 << 20))


# ----------------------------------------------------------------------------- kernel


def _glvq_kernel(x_ref, protos_ref, psq_ref, y_ref, plabels_ref, out_ref,
                 *, alpha, batch, tile_b):
    # x_ref:       (TB, D)       f32 or bf16  batch tile (MXU operand dtype)
    # protos_ref:  (P, D)        f32 or bf16  all prototypes (resident)
    # psq_ref:     (1, P)        f32          hoisted ||p||^2 (computed once, wrapper)
    # y_ref:       (TB, 1)       int32        labels for this tile
    # plabels_ref: (1, P)        int32        prototype labels
    # out_ref:     (1, 8, 128)   f32          lane-dense per-tile partial sum block
    i = pl.program_id(0)

    x = x_ref[...]                                   # (TB, D) MXU operand
    p = protos_ref[...]                              # (P, D)  MXU operand
    x32 = x.astype(jnp.float32)

    # Squared Euclidean distances: ||x||^2 + ||p||^2 - 2 x p^T (cross term on the MXU).
    x_sq = jnp.sum(x32 * x32, axis=-1, keepdims=True)                 # (TB, 1) f32
    xp = jax.lax.dot_general(
        x, p,
        dimension_numbers=(((1,), (1,)), ((), ())),
        preferred_element_type=jnp.float32,
    )                                                                  # (TB, P) f32
    dist = x_sq + psq_ref[...] - 2.0 * xp                              # (TB, P) f32

    # Masked mins over correct / incorrect prototypes.
    correct = plabels_ref[...] == y_ref[...]                           # (TB, P) bool
    inf = jnp.float32(jnp.inf)
    d1 = jnp.min(jnp.where(correct, dist, inf), axis=1, keepdims=True)  # (TB, 1)
    d2 = jnp.min(jnp.where(correct, inf, dist), axis=1, keepdims=True)  # (TB, 1)

    eps = jnp.float32(1e-9)
    mu = (d1 - d2) * pl.reciprocal(d1 + d2 + eps, approx=True)          # EUP slot
    fmu = jax.nn.sigmoid(jnp.float32(alpha) * mu)                       # (TB, 1) f32

    # Mask rows past the true batch (batch padding), reduce to a per-tile scalar,
    # and write it as one lane-dense vreg block (no (B,1) lane-sparse writeback).
    row = jax.lax.broadcasted_iota(jnp.int32, (tile_b, 1), 0) + i * tile_b
    fmu = jnp.where(row < batch, fmu, jnp.float32(0.0))
    tile_sum = jnp.sum(fmu)
    out_ref[...] = jnp.broadcast_to(tile_sum, out_ref.shape).astype(jnp.float32)


# ----------------------------------------------------------------------------- wrapper


def glvq_forward(x, y, prototypes, prototype_labels, *, alpha=1.0,
                 tile_b=512, mxu_dtype=jnp.float32):
    """GLVQ loss: mean(sigmoid(alpha * (d1 - d2) / (d1 + d2 + 1e-9))).

    mxu_dtype=jnp.bfloat16 halves HBM traffic for x / prototypes and uses the
    fast bf16 MXU path on v6e/v7x; all elementwise math stays f32.
    """
    B, D = x.shape
    P = prototypes.shape[0]
    itemsize = jnp.dtype(mxu_dtype).itemsize

    tb = _choose_tile_b(B, D, P, itemsize, requested=tile_b)
    num_tiles = pl.cdiv(B, tb)
    Bp = num_tiles * tb

    x_in = x.astype(mxu_dtype)
    y2d = y.astype(jnp.int32).reshape(B, 1)
    if Bp != B:  # pad the batch; padded rows are masked out inside the kernel
        x_in = jnp.pad(x_in, ((0, Bp - B), (0, 0)))
        y2d = jnp.pad(y2d, ((0, Bp - B), (0, 0)))
    protos_in = prototypes.astype(mxu_dtype)
    plabels2d = prototype_labels.astype(jnp.int32).reshape(1, P)
    # Hoisted prototype norm (computed once, full precision, outside the kernel).
    p_sq = jnp.sum(prototypes.astype(jnp.float32) ** 2, axis=-1).reshape(1, P)

    kernel = functools.partial(_glvq_kernel, alpha=float(alpha), batch=B, tile_b=tb)

    partials = pl.pallas_call(
        kernel,
        out_shape=jax.ShapeDtypeStruct((num_tiles, 8, 128), jnp.float32),
        grid_spec=pltpu.PrefetchScalarGridSpec(
            num_scalar_prefetch=0,
            grid=(num_tiles,),
            in_specs=[
                pl.BlockSpec((tb, D), lambda i: (i, 0)),   # x tile (streamed)
                pl.BlockSpec((P, D), lambda i: (0, 0)),    # prototypes (resident)
                pl.BlockSpec((1, P), lambda i: (0, 0)),    # ||p||^2 (resident)
                pl.BlockSpec((tb, 1), lambda i: (i, 0)),   # labels tile (streamed)
                pl.BlockSpec((1, P), lambda i: (0, 0)),    # prototype labels (resident)
            ],
            out_specs=pl.BlockSpec((1, 8, 128), lambda i: (i, 0, 0)),
        ),
        compiler_params=pltpu.CompilerParams(
            dimension_semantics=("parallel",),             # batch tiles are independent
            vmem_limit_bytes=_vmem_limit_bytes(tb, D, P, itemsize),
        ),
    )(x_in, protos_in, p_sq, y2d, plabels2d)

    # Each tile broadcast its partial sum across its (8,128) block; read one lane each.
    return jnp.sum(partials[:, 0, 0]) / jnp.float32(B)


# ----------------------------------------------------------------------------- glue / reference


def initialize_prototypes(x, y, num_classes, num_prototypes_per_class):
    """Mirror of GLVQ.initialize_prototypes: each class's prototype block = class mean."""
    D = x.shape[1]
    P = num_classes * num_prototypes_per_class
    protos = jnp.zeros((P, D), dtype=jnp.float32)
    for c in range(num_classes):
        mask = (y == c).astype(jnp.float32)[:, None]            # (B, 1)
        count = jnp.maximum(jnp.sum(mask), 1.0)
        class_mean = jnp.sum(x * mask, axis=0) / count          # (D,)
        start = c * num_prototypes_per_class
        protos = jax.lax.dynamic_update_slice(
            protos,
            jnp.tile(class_mean[None, :], (num_prototypes_per_class, 1)),
            (start, 0),
        )
    # NOTE: the PyTorch module defines prototype_labels = i % num_classes, which
    # does NOT match the block layout written by initialize_prototypes; we
    # reproduce the module's semantics exactly.
    plabels = jnp.arange(P, dtype=jnp.int32) % num_classes
    return protos, plabels


def glvq_reference(x, y, prototypes, prototype_labels, alpha=1.0):
    """Pure-JAX f32 reference of the PyTorch forward (explicit diff^2 distances)."""
    diff = x[:, None, :] - prototypes[None, :, :]
    dist = jnp.sum(diff * diff, axis=2)                          # (B, P)
    correct = prototype_labels[None, :] == y[:, None]            # (B, P)
    d1 = jnp.min(jnp.where(correct, dist, jnp.inf), axis=1)
    d2 = jnp.min(jnp.where(correct, jnp.inf, dist), axis=1)
    mu = (d1 - d2) / (d1 + d2 + 1e-9)
    return jnp.mean(jax.nn.sigmoid(alpha * mu))


# ----------------------------------------------------------------------------- demo


if __name__ == "__main__":
    # Small shapes consistent with the module's forward: flat features + labels.
    B = 16                       # batch
    D = 32                       # input_dim
    num_classes = 4
    num_prototypes_per_class = 2
    alpha = 1.0

    key = jax.random.PRNGKey(0)
    kx, ky = jax.random.split(key)
    x = jax.random.normal(kx, (B, D), dtype=jnp.float32)
    y = jax.random.randint(ky, (B,), 0, num_classes, dtype=jnp.int32)

    # Deterministic "first call" prototype initialization (class means), as in forward().
    prototypes, prototype_labels = initialize_prototypes(
        x, y, num_classes, num_prototypes_per_class
    )

    ref = jax.block_until_ready(
        glvq_reference(x, y, prototypes, prototype_labels, alpha=alpha)
    )

    # f32 MXU path (exact) — tight check.
    loss_f32 = jax.block_until_ready(
        glvq_forward(x, y, prototypes, prototype_labels, alpha=alpha,
                     mxu_dtype=jnp.float32)
    )
    # bf16 MXU operand path (v6e/v7x fast path) — loose check (bf16 rounding).
    loss_bf16 = jax.block_until_ready(
        glvq_forward(x, y, prototypes, prototype_labels, alpha=alpha,
                     mxu_dtype=jnp.bfloat16)
    )

    ok_f32 = bool(jnp.allclose(loss_f32, ref, rtol=2e-3, atol=1e-3))
    ok_bf16 = bool(jnp.allclose(loss_bf16, ref, rtol=0.0, atol=2e-2))

    if ok_f32 and ok_bf16:
        print("KERNEL_OK")
    else:
        print(f"MISMATCH f32={float(loss_f32)} bf16={float(loss_bf16)} ref={float(ref)}")
</pallas_src>

<mosaic_0001>
module attributes {stable_mosaic.version = 11 : i64} {
  func.func @_glvq_kernel(%arg0: i32, %arg1: memref<16x32xf32, #tpu.memory_space<vmem>>, %arg2: memref<8x32xf32, #tpu.memory_space<vmem>>, %arg3: memref<1x8xf32, #tpu.memory_space<vmem>>, %arg4: memref<16x1xi32, #tpu.memory_space<vmem>>, %arg5: memref<1x8xi32, #tpu.memory_space<vmem>>, %arg6: memref<1x8x128xf32, #tpu.memory_space<vmem>>) attributes {dimension_semantics = [#tpu.dimension_semantics<parallel>], iteration_bounds = array<i64: 1>, scalar_prefetch = 0 : i64, scratch_operands = 0 : i64, tpu.core_type = #tpu.core_type<tc>, window_params = [{transform_indices = @transform_0, window_bounds = array<i64: 16, 32>}, {pipeline_mode = #tpu.pipeline_mode<synchronous>, transform_indices = @transform_1, window_bounds = array<i64: 8, 32>}, {pipeline_mode = #tpu.pipeline_mode<synchronous>, transform_indices = @transform_2, window_bounds = array<i64: 1, 8>}, {transform_indices = @transform_3, window_bounds = array<i64: 16, 1>}, {pipeline_mode = #tpu.pipeline_mode<synchronous>, transform_indices = @transform_4, window_bounds = array<i64: 1, 8>}, {transform_indices = @transform_5, window_bounds = array<i64: 1, 8, 128>}]} {
    %c0 = arith.constant 0 : index
    %c0_0 = arith.constant 0 : index
    %0 = vector.load %arg1[%c0, %c0_0] : memref<16x32xf32, #tpu.memory_space<vmem>>, vector<16x32xf32>
    %c0_1 = arith.constant 0 : index
    %c0_2 = arith.constant 0 : index
    %1 = vector.load %arg2[%c0_1, %c0_2] : memref<8x32xf32, #tpu.memory_space<vmem>>, vector<8x32xf32>
    %2 = arith.mulf %0, %0 : vector<16x32xf32>
    %cst = arith.constant dense<0.000000e+00> : vector<16xf32>
    %3 = vector.multi_reduction <add>, %2, %cst [1] : vector<16x32xf32> to vector<16xf32>
    %4 = vector.shape_cast %3 : vector<16xf32> to vector<16x1xf32>
    %cst_3 = arith.constant dense<0.000000e+00> : vector<16x8xf32>
    %5 = tpu.matmul %0, %1, %cst_3 {dimension_numbers = #tpu.dot_dimension_numbers<[1], [1], [0], [0], [0, 0, 1, 0], [], []>} : vector<16x32xf32>, vector<8x32xf32>, vector<16x8xf32> -> vector<16x8xf32>
    %c0_4 = arith.constant 0 : index
    %c0_5 = arith.constant 0 : index
    %6 = vector.load %arg3[%c0_4, %c0_5] : memref<1x8xf32, #tpu.memory_space<vmem>>, vector<1x8xf32>
    %7 = vector.broadcast %4 : vector<16x1xf32> to vector<16x8xf32>
    %8 = vector.broadcast %6 : vector<1x8xf32> to vector<16x8xf32>
    %9 = arith.addf %7, %8 : vector<16x8xf32>
    %cst_6 = arith.constant 2.000000e+00 : f32
    %10 = vector.broadcast %cst_6 : f32 to vector<16x8xf32>
    %11 = arith.mulf %10, %5 : vector<16x8xf32>
    %12 = arith.subf %9, %11 : vector<16x8xf32>
    %c0_7 = arith.constant 0 : index
    %c0_8 = arith.constant 0 : index
    %13 = vector.load %arg5[%c0_7, %c0_8] : memref<1x8xi32, #tpu.memory_space<vmem>>, vector<1x8xi32>
    %c0_9 = arith.constant 0 : index
    %c0_10 = arith.constant 0 : index
    %14 = vector.load %arg4[%c0_9, %c0_10] : memref<16x1xi32, #tpu.memory_space<vmem>>, vector<16x1xi32>
    %15 = vector.broadcast %13 : vector<1x8xi32> to vector<16x8xi32>
    %16 = vector.broadcast %14 : vector<16x1xi32> to vector<16x8xi32>
    %17 = arith.cmpi eq, %15, %16 : vector<16x8xi32>
    %cst_11 = arith.constant 0x7F800000 : f32
    %18 = vector.broadcast %cst_11 : f32 to vector<16x8xf32>
    %19 = arith.select %17, %12, %18 : vector<16x8xi1>, vector<16x8xf32>
    %cst_12 = arith.constant dense<0x7F800000> : vector<16xf32>
    %20 = vector.multi_reduction <minimumf>, %19, %cst_12 [1] : vector<16x8xf32> to vector<16xf32>
    %21 = vector.shape_cast %20 : vector<16xf32> to vector<16x1xf32>
    %cst_13 = arith.constant 0x7F800000 : f32
    %22 = vector.broadcast %cst_13 : f32 to vector<16x8xf32>
    %23 = arith.select %17, %22, %12 : vector<16x8xi1>, vector<16x8xf32>
    %cst_14 = arith.constant dense<0x7F800000> : vector<16xf32>
    %24 = vector.multi_reduction <minimumf>, %23, %cst_14 [1] : vector<16x8xf32> to vector<16xf32>
    %25 = vector.shape_cast %24 : vector<16xf32> to vector<16x1xf32>
    %26 = arith.subf %21, %25 : vector<16x1xf32>
    %27 = arith.addf %21, %25 : vector<16x1xf32>
    %cst_15 = arith.constant 9.99999971E-10 : f32
    %28 = vector.broadcast %cst_15 : f32 to vector<16x1xf32>
    %29 = arith.addf %27, %28 : vector<16x1xf32>
    %30 = tpu.reciprocal %29 {approx = true} : vector<16x1xf32> -> vector<16x1xf32>
    %31 = arith.mulf %26, %30 : vector<16x1xf32>
    %cst_16 = arith.constant 1.000000e+00 : f32
    %32 = vector.broadcast %cst_16 : f32 to vector<16x1xf32>
    %33 = arith.mulf %32, %31 : vector<16x1xf32>
    %34 = arith.negf %33 : vector<16x1xf32>
    %35 = math.exp %34 : vector<16x1xf32>
    %cst_17 = arith.constant 1.000000e+00 : f32
    %36 = vector.broadcast %cst_17 : f32 to vector<16x1xf32>
    %37 = arith.addf %36, %35 : vector<16x1xf32>
    %38 = arith.divf %36, %37 : vector<16x1xf32>
    %39 = tpu.iota {dimensions = array<i32: 0>} : vector<16x1xi32>
    %c16_i32 = arith.constant 16 : i32
    %40 = arith.muli %arg0, %c16_i32 : i32
    %41 = vector.broadcast %40 : i32 to vector<16x1xi32>
    %42 = arith.addi %39, %41 : vector<16x1xi32>
    %c16_i32_18 = arith.constant 16 : i32
    %43 = vector.broadcast %c16_i32_18 : i32 to vector<16x1xi32>
    %44 = arith.cmpi slt, %42, %43 : vector<16x1xi32>
    %cst_19 = arith.constant 0.000000e+00 : f32
    %45 = vector.broadcast %cst_19 : f32 to vector<16x1xf32>
    %46 = arith.select %44, %38, %45 : vector<16x1xi1>, vector<16x1xf32>
    %47 = vector.shape_cast %46 : vector<16x1xf32> to vector<1x16x1xf32>
    %cst_20 = arith.constant dense<0.000000e+00> : vector<1xf32>
    %48 = vector.multi_reduction <add>, %47, %cst_20 [1, 2] : vector<1x16x1xf32> to vector<1xf32>
    %49 = vector.shape_cast %48 : vector<1xf32> to vector<1x1x1xf32>
    %50 = vector.extract %49[0, 0, 0] : f32 from vector<1x1x1xf32>
    %51 = vector.broadcast %50 : f32 to vector<1x8x128xf32>
    %c0_21 = arith.constant 0 : index
    %c0_22 = arith.constant 0 : index
    %c0_23 = arith.constant 0 : index
    %52 = vector.load %arg6[%c0_21, %c0_22, %c0_23] : memref<1x8x128xf32, #tpu.memory_space<vmem>>, vector<1x8x128xf32>
    tpu.vector_store %arg6[%c0_21, %c0_22, %c0_23], %51 {strides = array<i32>} : memref<1x8x128xf32, #tpu.memory_space<vmem>>, vector<1x8x128xf32>,
    return
  }
  func.func @transform_0(%arg0: i32) -> (i32, i32) {
    %c0_i32 = arith.constant 0 : i32
    %c0_i32_0 = arith.constant 0 : i32
    return %arg0, %c0_i32 : i32, i32
  }
  func.func @transform_1(%arg0: i32) -> (i32, i32) {
    %c0_i32 = arith.constant 0 : i32
    %c0_i32_0 = arith.constant 0 : i32
    %c0_i32_1 = arith.constant 0 : i32
    return %c0_i32, %c0_i32_0 : i32, i32
  }
  func.func @transform_2(%arg0: i32) -> (i32, i32) {
    %c0_i32 = arith.constant 0 : i32
    %c0_i32_0 = arith.constant 0 : i32
    %c0_i32_1 = arith.constant 0 : i32
    return %c0_i32, %c0_i32_0 : i32, i32
  }
  func.func @transform_3(%arg0: i32) -> (i32, i32) {
    %c0_i32 = arith.constant 0 : i32
    %c0_i32_0 = arith.constant 0 : i32
    return %arg0, %c0_i32 : i32, i32
  }
  func.func @transform_4(%arg0: i32) -> (i32, i32) {
    %c0_i32 = arith.constant 0 : i32
    %c0_i32_0 = arith.constant 0 : i32
    %c0_i32_1 = arith.constant 0 : i32
    return %c0_i32, %c0_i32_0 : i32, i32
  }
  func.func @transform_5(%arg0: i32) -> (i32, i32, i32) {
    %c0_i32 = arith.constant 0 : i32
    %c0_i32_0 = arith.constant 0 : i32
    %c0_i32_1 = arith.constant 0 : i32
    return %arg0, %c0_i32, %c0_i32_0 : i32, i32, i32
  }
}

</mosaic_0001>

<llo_original>
// kernel: tpu_custom_call.1
$region0: #{tpu_custom_call.1}
  #allocation0 [shape = 'u32[]', space=smem, size = 0x4, offset = 0x4, fixed_abs, tag = 'smem constant byte address 0x4 - core index']
  #allocation1 [shape = 'u32[144,128]{1,0:T(1,128)}', space=vmem, size = 0x12000, scoped, tag = 'internal scratch']
  %s0 = inlined_call_operand.vmem [shape: f32[16,32], index: 0, kind: input, shape index: {}]
  %s1 = inlined_call_operand.hbm [shape: f32[8,32], index: 1, kind: input, shape index: {}]
  %s2 = inlined_call_operand.vmem [shape: f32[1,8], index: 2, kind: input, shape index: {}]
  %s3 = inlined_call_operand.vmem [shape: s32[16,1], index: 3, kind: input, shape index: {}]
  %s4 = inlined_call_operand.vmem [shape: s32[1,8], index: 4, kind: input, shape index: {}]
  %s5 = inlined_call_operand.hbm [shape: f32[1,8,128], index: 5, kind: output, shape index: {}]
  %s6 = sld [smem:[#allocation0]]
  $region34: #{tpu_custom_call.1} parent=0
    _
  %s8 = ssub.s32 1, %s6
  %s9 = scalar_select 0, %s8, %s6
  $region1: #{tpu_custom_call.1} parent=0
    #allocation2 [shape = 'u8[4096]{0}', space=vmem, size = 0x1000, scoped, tag = 'input window, operand 1, single buffered']
    #allocation3 [shape = 's32[1]{0}', space=sflag, size = 0x4, scoped, tag = 'scoped memory for tpu_custom_call.1']
    #allocation4 [shape = 's32[1]{0}', space=sflag, size = 0x4, scoped, tag = 'scoped memory for tpu_custom_call.1']
    #allocation5 [shape = 'u8[4096]{0}', space=vmem, size = 0x1000, scoped, tag = 'output window, operand 0, single buffered']
    %10 = vsyncpa [#allocation3], 0
    %11 = vsyncpa [#allocation4], 0
    // Predicated region
    $region2: #{tpu_custom_call.1} parent=1 // pred_check
      _
    $region3: #{tpu_custom_call.1} parent=1 // pred_check_branch
      %13 = sbr.rel (0) target = $region5
    $region4: #{tpu_custom_call.1} parent=1 // pred_region
      _
    $region5: #{tpu_custom_call.1} parent=1 // pred_fallthru
      _
    // Predicated region
    $region6: #{tpu_custom_call.1} parent=1 // pred_check
      _
    $region7: #{tpu_custom_call.1} parent=1 // pred_check_branch
      %15 = sbr.rel (0) target = $region9
    $region8: #{tpu_custom_call.1} parent=1 // pred_region
      %s17 = ssub.s32 128, 128
      %18 = vsyncadd [#allocation3], %s17
      %s20 = sshll.u32 [#allocation2], 4
      %s21 = int_to_ptr.vmem [resolvable:$true] %s20
      %23 = dma.hbm_to_vmem [thread:$0]  %s1, 128, %s21, [#allocation3]
    $region9: #{tpu_custom_call.1} parent=1 // pred_fallthru
      _
    // Predicated region
    $region10: #{tpu_custom_call.1} parent=1 // pred_check
      _
    $region11: #{tpu_custom_call.1} parent=1 // pred_check_branch
      %25 = sbr.rel (0) target = $region13
    $region12: #{tpu_custom_call.1} parent=1 // pred_region
      _
    $region13: #{tpu_custom_call.1} parent=1 // pred_fallthru
      _
    // Predicated region
    $region14: #{tpu_custom_call.1} parent=1 // pred_check
      _
    $region15: #{tpu_custom_call.1} parent=1 // pred_check_branch
      %27 = sbr.rel (0) target = $region17
    $region16: #{tpu_custom_call.1} parent=1 // pred_region
      _
    $region17: #{tpu_custom_call.1} parent=1 // pred_fallthru
      _
    // Predicated region
    $region18: #{tpu_custom_call.1} parent=1 // pred_check
      _
    $region19: #{tpu_custom_call.1} parent=1 // pred_check_branch
      %29 = sbr.rel (0) target = $region21
    $region20: #{tpu_custom_call.1} parent=1 // pred_region
      _
    $region21: #{tpu_custom_call.1} parent=1 // pred_fallthru
      _
    // Predicated region
    $region22: #{tpu_custom_call.1} parent=1 // pred_check
      _
    $region23: #{tpu_custom_call.1} parent=1 // pred_check_branch
      %31 = sbr.rel (0) target = $region25
    $region24: #{tpu_custom_call.1} parent=1 // pred_region
      %32 = dma.done [#allocation3], 128
    $region25: #{tpu_custom_call.1} parent=1 // pred_fallthru
      _
    %v33 = vld [vmem:[%s0] sm:$0xff]
    %v34 = vld [vmem:[%s0 + $0x8] sm:$0xff]
    %v35 = vld [vmem:[#allocation2] sm:$0xff]
    %v36 = vmul.f32 %v33, %v33
    %v37 = vmul.f32 %v34, %v34
    %vm38 = vcmask 261120
    %v39 = vsel %vm38, %v36, 0.0
    %40 = vadd.xlane.f32.xlu0 %v39
    %v41 = vpop.xlane.xlu0 %40
    %v42 = vsel %vm38, %v37, 0.0
    %43 = vadd.xlane.f32.xlu0 %v42
    %v44 = vpop.xlane.xlu0 %43
    %v46 = vsel %vm38, %v33, 0
    %v49 = vsel %vm38, %v34, 0
    %v52 = vsel %vm38, %v35, 0
    %54 = vmatprep.subr.mxu0 0.0
    %55 = vmatpush1.xpose.msra.mxu0 %v52
    %56 = vmatprep.subr.mxu0 0.0
    %57 = vmatpush1.xpose.msra.mxu0 0.0
    %58 = vmatprep.subr.mxu0 0.0
    %59 = vmatpush1.xpose.msra.mxu0 0.0
    %60 = vmatprep.subr.mxu0 0.0
    %61 = vmatpush1.xpose.msra.mxu0 0.0
    %62 = vmatprep.subr.mxu0 0.0
    %63 = vmatpush1.xpose.msra.mxu0 0.0
    %64 = vmatprep.subr.mxu0 0.0
    %65 = vmatpush1.xpose.msra.mxu0 0.0
    %66 = vmatprep.subr.mxu0 0.0
    %67 = vmatpush1.xpose.msra.mxu0 0.0
    %68 = vmatprep.subr.mxu0 0.0
    %69 = vmatpush1.xpose.msra.mxu0 0.0
    %70 = vmatprep.subr.mxu0 0.0
    %71 = vmatpush1.xpose.msra.mxu0 0.0
    %72 = vmatprep.subr.mxu0 0.0
    %73 = vmatpush1.xpose.msra.mxu0 0.0
    %74 = vmatprep.subr.mxu0 0.0
    %75 = vmatpush1.xpose.msra.mxu0 0.0
    %76 = vmatprep.subr.mxu0 0.0
    %77 = vmatpush1.xpose.msra.mxu0 0.0
    %78 = vmatprep.subr.mxu0 0.0
    %79 = vmatpush1.xpose.msra.mxu0 0.0
    %80 = vmatprep.subr.mxu0 0.0
    %81 = vmatpush1.xpose.msra.mxu0 0.0
    %82 = vmatprep.subr.mxu0 0.0
    %83 = vmatpush1.xpose.msra.mxu0 0.0
    %84 = vmatprep.subr.mxu0 0.0
    %85 = vmatpush1.xpose.msra.mxu0 0.0
    %86 = vmatprep.subr.mxu0 0.0
    %87 = vmatpush1.xpose.msra.mxu0 0.0
    %88 = vmatprep.subr.mxu0 0.0
    %89 = vmatpush1.xpose.msra.mxu0 0.0
    %90 = vmatprep.subr.mxu0 0.0
    %91 = vmatpush1.xpose.msra.mxu0 0.0
    %92 = vmatprep.subr.mxu0 0.0
    %93 = vmatpush1.xpose.msra.mxu0 0.0
    %94 = vmatprep.subr.mxu0 0.0
    %95 = vmatpush1.xpose.msra.mxu0 0.0
    %96 = vmatprep.subr.mxu0 0.0
    %97 = vmatpush1.xpose.msra.mxu0 0.0
    %98 = vmatprep.subr.mxu0 0.0
    %99 = vmatpush1.xpose.msra.mxu0 0.0
    %100 = vmatprep.subr.mxu0 0.0
    %101 = vmatpush1.xpose.msra.mxu0 0.0
    %102 = vmatprep.subr.mxu0 0.0
    %103 = vmatpush1.xpose.msra.mxu0 0.0
    %104 = vmatprep.subr.mxu0 0.0
    %105 = vmatpush1.xpose.msra.mxu0 0.0
    %106 = vmatprep.subr.mxu0 0.0
    %107 = vmatpush1.xpose.msra.mxu0 0.0
    %108 = vmatprep.subr.mxu0 0.0
    %109 = vmatpush1.xpose.msra.mxu0 0.0
    %110 = vmatprep.subr.mxu0 0.0
    %111 = vmatpush1.xpose.msra.mxu0 0.0
    %112 = vmatprep.subr.mxu0 0.0
    %113 = vmatpush1.xpose.msra.mxu0 0.0
    %114 = vmatprep.subr.mxu0 0.0
    %115 = vmatpush1.xpose.msra.mxu0 0.0
    %116 = vmatprep.subr.mxu0 0.0
    %117 = vmatpush1.xpose.msra.mxu0 0.0
    %118 = vmatprep.mubr.f32.mxu0 0.0
    %119 = vmatmul.mubr.f32.gmra.mrb[0].mxu0 %v46
    %v120 = vpop.f32.mrb[0].mxu0
    %v121 = vadd.f32 0.0, %v120
    %v122 = vpop.f32.mrb[0].mxu0
    %123 = vmatprep.mubr.f32.mxu0 0.0
    %124 = vmatmul.mubr.f32.gmra.mrb[0].mxu0 %v49
    %v125 = vpop.f32.mrb[0].mxu0
    %v126 = vadd.f32 0.0, %v125
    %v127 = vpop.f32.mrb[0].mxu0
    %128 = vdwg.mxu0
    %v129 = vld [vmem:[%s2] sm:$0x1]
    %v131 = vlaneseq
    %v132 = vshrl.u32 %v131, 7
    %v133 = vsub.s32 0, %v132
    %v134 = vrot.slane %v129, %v133
    %v136 = vadd.f32 %v41, %v134
    %v137 = vadd.f32 %v44, %v134
    %v138 = vmul.f32 %v121, 2.0
    %v139 = vmul.f32 %v126, 2.0
    %v140 = vsub.f32 %v136, %v138
    %v141 = vsub.f32 %v137, %v139
    %v142 = vld [vmem:[%s4] sm:$0x1]
    %v143 = vld [vmem:[%s3] sm:$0xff]
    %v144 = vld [vmem:[%s3 + $0x8] sm:$0xff]
    %v145 = vlaneseq
    %v146 = vshrl.u32 %v145, 7
    %v147 = vsub.s32 0, %v146
    %v148 = vrot.slane %v142, %v147
    %149 = vset.pattern.permute.xlu0 0
    %150 = vperm.xlu0 %149, %v143
    %v151 = vpop.permute.xlu0 %150
    %152 = vset.pattern.permute.xlu0 0
    %153 = vperm.xlu0 %152, %v144
    %v154 = vpop.permute.xlu0 %153
    %vm155 = vcmp.eq.s32.totalorder %v148, %v151
    %vm156 = vcmp.eq.s32.totalorder %v148, %v154
    %v157 = vsel %vm155, %v140, inf
    %v158 = vsel %vm156, %v141, inf
    %vm159 = vcmask 64512
    %v160 = vsel %vm159, %v157, inf
    %161 = vmin.xlane.f32.xlu0 %v160
    %v162 = vpop.xlane.xlu0 %161
    %v163 = vsel %vm159, %v158, inf
    %164 = vmin.xlane.f32.xlu0 %v163
    %v165 = vpop.xlane.xlu0 %164
    %v166 = vsel %vm155, inf, %v140
    %v167 = vsel %vm156, inf, %v141
    %v168 = vsel %vm159, %v166, inf
    %169 = vmin.xlane.f32.xlu0 %v168
    %v170 = vpop.xlane.xlu0 %169
    %v171 = vsel %vm159, %v167, inf
    %172 = vmin.xlane.f32.xlu0 %v171
    %v173 = vpop.xlane.xlu0 %172
    %v174 = vsub.f32 %v162, %v170
    %v175 = vsub.f32 %v165, %v173
    %v176 = vadd.f32 %v162, %v170
    %v177 = vadd.f32 %v165, %v173
    %v178 = vadd.f32 %v176, 1e-09
    %v179 = vadd.f32 %v177, 1e-09
    %v180 = vrcp.pop %v178
    %v181 = vrcp.pop %v179
    %v182 = vmul.f32 %v174, %v180
    %v183 = vmul.f32 %v175, %v181
    %v184 = vxor.u32 %v182, 2147483648
    %v185 = vxor.u32 %v183, 2147483648
    %v186 = vmul.f32 %v184, 1.442695
    %v187 = vpow.pop %v186
    %v188 = vmul.f32 %v185, 1.442695
    %v189 = vpow.pop %v188
    %v190 = vadd.f32 %v187, 1.0
    %v191 = vadd.f32 %v189, 1.0
    %v192 = vrcp.pop %v190
    %v193 = vmul.f32 1.0, %v192
    %v194 = vrcp.pop %v191
    %v195 = vmul.f32 1.0, %v194
    %v196 = vlaneseq
    %v197 = vshrl.u32 %v196, 7
    %v198 = vadd.s32 %v197, 8
    %s199 = smul.u32 0, 16
    %v200 = vstv %s199
    %v201 = vadd.s32 %v197, %v200
    %v202 = vadd.s32 %v198, %v200
    %vm203 = vcmp.lt.s32.totalorder %v201, 16
    %vm204 = vcmp.lt.s32.totalorder %v202, 16
    %v205 = vsel %vm203, %v193, 0.0
    %v206 = vsel %vm204, %v195, 0.0
    %vm207 = vcmask 7168
    %v208 = vsel %vm207, %v205, 0.0
    %v209 = vsel %vm207, %v206, 0.0
    %v210 = vadd.f32 %v208, %v209
    %211 = vadd.xlane.f32.xlu0 %v210
    %v212 = vpop.xlane.xlu0 %211
    %v213 = vrot.slane %v212, 4
    %v214 = vadd.f32 %v212, %v213
    %v215 = vrot.slane %v214, 2
    %v216 = vadd.f32 %v214, %v215
    %v217 = vrot.slane %v216, 1
    %v218 = vadd.f32 %v216, %v217
    %s219 = vtos %v218
    %v220 = vstv %s219
    %221 = vst [vmem:[#allocation5] sm:$0xff] %v220
    // Predicated region
    $region26: #{tpu_custom_call.1} parent=1 // pred_check
      _
    $region27: #{tpu_custom_call.1} parent=1 // pred_check_branch
      %223 = sbr.rel (0) target = $region29
    $region28: #{tpu_custom_call.1} parent=1 // pred_region
      %s225 = ssub.s32 128, 128
      %226 = vsyncadd [#allocation4], %s225
      %s228 = sshll.u32 [#allocation5], 4
      %s229 = int_to_ptr.vmem [resolvable:$true] %s228
      %231 = dma.vmem_to_hbm [thread:$0]  %s229, 128, %s5, [#allocation4]
    $region29: #{tpu_custom_call.1} parent=1 // pred_fallthru
      _
    // Predicated region
    $region30: #{tpu_custom_call.1} parent=1 // pred_check
      _
    $region31: #{tpu_custom_call.1} parent=1 // pred_check_branch
      %233 = sbr.rel (0) target = $region33
    $region32: #{tpu_custom_call.1} parent=1 // pred_region
      %234 = dma.done [#allocation4], 128
    $region33: #{tpu_custom_call.1} parent=1 // pred_fallthru
      _
    %235 = vsyncpa [#allocation3], 1
    %236 = vsyncpa [#allocation4], 1

</llo_original>
